<compile_context>
chip_gen: v5e
topology: v5e:2x2
jax: 0.10.0
libtpu: 0.0.40
codegen_flags: <defaults>
</compile_context>

<pallas_src>
import numpy as np
import jax
import jax.numpy as jnp
from jax import lax
from jax.experimental import pallas as pl
from jax.experimental.pallas import tpu as pltpu


def _round_up(x, m):
    return ((x + m - 1) // m) * m


# ---------------------------------------------------------------------------
# Kernel 1 (fused): per-edge messages + mean aggregation + node self update.
#   grid = (node tiles ["parallel"], edge blocks per node tile ["arbitrary"]).
#   Edges are pre-sorted by dst; eblk_off/eblk_cnt (scalar prefetch, SMEM)
#   give the range of edge blocks holding each node tile's incoming edges.
# ---------------------------------------------------------------------------
def fused_msg_agg_node_kernel(eblk_off_ref, eblk_cnt_ref,        # scalar prefetch
                              dst_ref, comp_ref, mask_ref, ent_ref,
                              woi_ref, boi_ref, ws_ref, bs_ref,
                              out_ref, acc_ref, deg_ref):
    i = pl.program_id(0)
    j = pl.program_id(1)
    tn = out_ref.shape[0]
    d = out_ref.shape[1]
    te = dst_ref.shape[1]

    @pl.when(j == 0)
    def _init():
        acc_ref[...] = jnp.zeros_like(acc_ref)
        deg_ref[...] = jnp.zeros_like(deg_ref)

    # Only edge blocks that can contain this node tile's incoming edges.
    @pl.when(j < eblk_cnt_ref[i])
    def _accumulate():
        # Per-edge messages: one fused [te, K] x [K, 2D] bf16 MXU matmul,
        # halves selected by edge direction.  Boundary blocks shared by two
        # node tiles are recomputed instead of round-tripping msg via HBM.
        y = jnp.dot(comp_ref[...], woi_ref[...],
                    preferred_element_type=jnp.float32) + boi_ref[...]   # [te, 2D]
        msg = jnp.where(mask_ref[...] > 0.5, y[:, :d], y[:, d:])         # [te, D]

        # Scatter to destination nodes: one-hot built on the fly (iota==dst),
        # fed to the MXU; in-degree comes for free as its lane-sum.
        node_ids = i * tn + lax.broadcasted_iota(jnp.int32, (tn, te), 0)
        match = node_ids == dst_ref[...]                                  # [tn, te]
        acc_ref[...] += jnp.dot(match.astype(jnp.bfloat16),
                                msg.astype(jnp.bfloat16),
                                preferred_element_type=jnp.float32)       # [tn, D]
        deg_ref[...] += jnp.sum(match.astype(jnp.float32), axis=1,
                                keepdims=True)                            # [tn, 1]

    @pl.when(j == pl.num_programs(1) - 1)
    def _finalize():
        deg = deg_ref[...]
        inv = jnp.where(deg > 0.0, 1.0 / jnp.maximum(deg, 1.0), 0.0)
        h_self = jnp.dot(ent_ref[...], ws_ref[...],
                         preferred_element_type=jnp.float32) + bs_ref[...]
        out_ref[...] = h_self + acc_ref[...] * inv                        # W_S(h)+mean


# ---------------------------------------------------------------------------
# Kernel 2: relation update W_R(rel_emb).  rel_emb is tiny; single untiled
# invocation (kept in Pallas, could equally be left to XLA).
# ---------------------------------------------------------------------------
def rel_kernel(rel_ref, wr_ref, br_ref, out_ref):
    out_ref[...] = jnp.dot(rel_ref[...], wr_ref[...],
                           preferred_element_type=jnp.float32) + br_ref[...]


def ext_gnn_layer(ent_emb, rel_emb, src, dst, etype, num_rel, params,
                  *, tn=256, te=256):
    """ExtGNNLayer forward.  Graph bookkeeping (edge sort by dst, per-tile
    edge-block ranges) is host-side preprocessing; per-edge gathers are XLA
    glue; messages, aggregation, node and relation updates run in Pallas."""
    N, D = ent_emb.shape
    rel_dim = rel_emb.shape[1]
    E = src.shape[0]
    K = rel_dim + D

    # ---- tile sizes (sublane multiple of 8, lane multiple of 128) ----------
    tn = _round_up(max(8, min(tn, _round_up(N, 8))), 8)
    te = _round_up(max(128, min(te, _round_up(E, 128))), 128)
    N_pad = _round_up(N, tn)
    E_pad = _round_up(E, te)
    n_tiles = N_pad // tn
    n_eblk = E_pad // te

    # ---- host-side graph preprocessing (static per graph) ------------------
    dst_np = np.asarray(jax.device_get(dst)).astype(np.int64)
    order_np = np.argsort(dst_np, kind="stable")
    dst_sorted_np = dst_np[order_np]
    tile_lo = np.arange(n_tiles, dtype=np.int64) * tn
    starts = np.searchsorted(dst_sorted_np, tile_lo)
    ends = np.searchsorted(dst_sorted_np, tile_lo + tn)
    eblk_off = np.minimum(starts // te, n_eblk - 1).astype(np.int32)
    eblk_cnt = np.where(ends > starts,
                        (ends + te - 1) // te - starts // te, 0).astype(np.int32)
    n_eblk_per_tile = max(1, int(eblk_cnt.max()))     # static grid extent

    # ---- device-side glue ---------------------------------------------------
    # TODO(synk): the per-edge gather/concat below could be moved in-kernel
    # with scalar-prefetch row DMAs to avoid materializing `comp` in HBM.
    order = jnp.asarray(order_np)
    src_s = src[order]
    etype_s = etype[order]
    dst_s = jnp.asarray(dst_sorted_np.astype(np.int32))

    comp = jnp.concatenate([rel_emb[etype_s], ent_emb[src_s]], axis=-1)   # [E, K]
    mask = (etype_s < num_rel).astype(jnp.float32)[:, None]               # [E, 1]

    comp = jnp.pad(comp, ((0, E_pad - E), (0, 0))).astype(jnp.bfloat16)
    mask = jnp.pad(mask, ((0, E_pad - E), (0, 0)))
    # padded edges get a sentinel dst >= N_pad so they never match any node
    dst_pad = jnp.pad(dst_s, (0, E_pad - E), constant_values=N_pad)[None, :]
    ent_pad = jnp.pad(ent_emb, ((0, N_pad - N), (0, 0)))

    # Fused direction weights / biases: [K, 2D], [1, 2D]
    woi = jnp.concatenate([params["W_O_t"], params["W_I_t"]],
                          axis=1).astype(jnp.bfloat16)
    boi = jnp.concatenate([params["b_O"], params["b_I"]], axis=1)

    clamp = n_eblk - 1

    def edge_blk(i, j, off, cnt):
        # data-dependent edge-block index; freezes once this tile has run out
        # of edge blocks so skipped pipeline steps do not re-issue DMAs, and
        # stays in bounds for tiles with zero incoming edges.
        jj = jnp.minimum(j, jnp.maximum(cnt[i] - 1, 0))
        return jnp.minimum(off[i] + jj, clamp)

    # ---- Kernel 1: fused messages + aggregation + node update ---------------
    ent_new_pad = pl.pallas_call(
        fused_msg_agg_node_kernel,
        out_shape=jax.ShapeDtypeStruct((N_pad, D), jnp.float32),
        grid_spec=pltpu.PrefetchScalarGridSpec(
            num_scalar_prefetch=2,
            grid=(n_tiles, n_eblk_per_tile),
            in_specs=[
                pl.BlockSpec((1, te),
                             lambda i, j, off, cnt: (0, edge_blk(i, j, off, cnt))),
                pl.BlockSpec((te, K),
                             lambda i, j, off, cnt: (edge_blk(i, j, off, cnt), 0)),
                pl.BlockSpec((te, 1),
                             lambda i, j, off, cnt: (edge_blk(i, j, off, cnt), 0)),
                pl.BlockSpec((tn, D), lambda i, j, off, cnt: (i, 0)),
                pl.BlockSpec((K, 2 * D), lambda i, j, off, cnt: (0, 0)),
                pl.BlockSpec((1, 2 * D), lambda i, j, off, cnt: (0, 0)),
                pl.BlockSpec((D, D), lambda i, j, off, cnt: (0, 0)),
                pl.BlockSpec((1, D), lambda i, j, off, cnt: (0, 0)),
            ],
            out_specs=pl.BlockSpec((tn, D), lambda i, j, off, cnt: (i, 0)),
            scratch_shapes=[pltpu.VMEM((tn, D), jnp.float32),
                            pltpu.VMEM((tn, 1), jnp.float32)],
        ),
        compiler_params=pltpu.CompilerParams(
            dimension_semantics=("parallel", "arbitrary")),
    )(jnp.asarray(eblk_off), jnp.asarray(eblk_cnt),
      dst_pad, comp, mask, ent_pad, woi, boi, params["W_S_t"], params["b_S"])
    ent_new = ent_new_pad[:N]

    # ---- Kernel 2: relation update ------------------------------------------
    rel_new = pl.pallas_call(
        rel_kernel,
        out_shape=jax.ShapeDtypeStruct(rel_emb.shape, jnp.float32),
    )(rel_emb, params["W_R_t"], params["b_R"])

    return ent_new, rel_new


def reference(ent_emb, rel_emb, src, dst, etype, num_rel, params):
    """Pure-JAX f32 reference mirroring the PyTorch/DGL semantics."""
    N = ent_emb.shape[0]
    comp = jnp.concatenate([rel_emb[etype], ent_emb[src]], axis=-1)
    msg_o = comp @ params["W_O_t"] + params["b_O"]
    msg_i = comp @ params["W_I_t"] + params["b_I"]
    msg = jnp.where((etype < num_rel)[:, None], msg_o, msg_i)
    summed = jax.ops.segment_sum(msg, dst, num_segments=N)
    cnt = jax.ops.segment_sum(jnp.ones_like(dst, dtype=jnp.float32), dst,
                              num_segments=N)
    h_agg = jnp.where(cnt[:, None] > 0,
                      summed / jnp.maximum(cnt, 1.0)[:, None], 0.0)
    ent_new = ent_emb @ params["W_S_t"] + params["b_S"] + h_agg
    rel_new = rel_emb @ params["W_R_t"] + params["b_R"]
    return ent_new, rel_new


if __name__ == "__main__":
    # Small deterministic problem sizes: multiple edge blocks, multiple node
    # tiles, and a few nodes with no incoming edges (zero-degree path).
    num_nodes = 24
    num_edges = 300
    ent_dim = 32
    rel_dim = 16
    num_rel = 4                     # etype in [0, 2*num_rel); >= num_rel are inverse
    num_rel_total = 2 * num_rel

    key = jax.random.PRNGKey(0)
    keys = jax.random.split(key, 12)

    ent_emb = jax.random.normal(keys[0], (num_nodes, ent_dim), jnp.float32)
    rel_emb = jax.random.normal(keys[1], (num_rel_total, rel_dim), jnp.float32)
    src = jax.random.randint(keys[2], (num_edges,), 0, num_nodes)
    # leave the last few nodes without incoming edges (h_agg must be 0 there)
    dst = jax.random.randint(keys[3], (num_edges,), 0, num_nodes - 4)
    etype = jax.random.randint(keys[4], (num_edges,), 0, num_rel_total)

    # nn.Linear weights stored pre-transposed [in, out], biases as [1, out].
    def linear_params(kw, kb, in_dim, out_dim):
        w = jax.random.normal(kw, (out_dim, in_dim), jnp.float32) * 0.1
        b = jax.random.normal(kb, (out_dim,), jnp.float32) * 0.1
        return w.T, b[None, :]

    W_O_t, b_O = linear_params(keys[5], keys[6], rel_dim + ent_dim, ent_dim)
    W_I_t, b_I = linear_params(keys[7], keys[8], rel_dim + ent_dim, ent_dim)
    W_S_t, b_S = linear_params(keys[9], keys[10], ent_dim, ent_dim)
    kw, kb = jax.random.split(keys[11])
    W_R_t, b_R = linear_params(kw, kb, rel_dim, rel_dim)

    params = dict(W_O_t=W_O_t, b_O=b_O, W_I_t=W_I_t, b_I=b_I,
                  W_S_t=W_S_t, b_S=b_S, W_R_t=W_R_t, b_R=b_R)

    ent_new, rel_new = ext_gnn_layer(ent_emb, rel_emb, src, dst, etype,
                                     num_rel, params, tn=8, te=128)
    jax.block_until_ready((ent_new, rel_new))

    ent_ref, rel_ref = reference(ent_emb, rel_emb, src, dst, etype,
                                 num_rel, params)
    # bf16 MXU inputs (f32 accumulation) in the edge-message / scatter path.
    assert jnp.allclose(ent_new, ent_ref, atol=3e-2, rtol=3e-2)
    assert jnp.allclose(rel_new, rel_ref, atol=3e-2, rtol=3e-2)

    print("KERNEL_OK")
</pallas_src>

<mosaic_0001>
module attributes {stable_mosaic.version = 11 : i64} {
  func.func @fused_msg_agg_node_kernel(%arg0: i32, %arg1: i32, %arg2: memref<3xi32, #tpu.memory_space<smem>>, %arg3: memref<3xi32, #tpu.memory_space<smem>>, %arg4: memref<1x128xi32, #tpu.memory_space<vmem>>, %arg5: memref<128x48xbf16, #tpu.memory_space<vmem>>, %arg6: memref<128x1xf32, #tpu.memory_space<vmem>>, %arg7: memref<8x32xf32, #tpu.memory_space<vmem>>, %arg8: memref<48x64xbf16, #tpu.memory_space<vmem>>, %arg9: memref<1x64xf32, #tpu.memory_space<vmem>>, %arg10: memref<32x32xf32, #tpu.memory_space<vmem>>, %arg11: memref<1x32xf32, #tpu.memory_space<vmem>>, %arg12: memref<8x32xf32, #tpu.memory_space<vmem>>, %arg13: memref<8x32xf32, #tpu.memory_space<vmem>>, %arg14: memref<8x1xf32, #tpu.memory_space<vmem>>) attributes {dimension_semantics = [#tpu.dimension_semantics<parallel>, #tpu.dimension_semantics<arbitrary>], iteration_bounds = array<i64: 3, 2>, scalar_prefetch = 2 : i64, scratch_operands = 2 : i64, tpu.core_type = #tpu.core_type<tc>, window_params = [{transform_indices = @transform_0, window_bounds = array<i64: 1, 128>}, {transform_indices = @transform_1, window_bounds = array<i64: 128, 48>}, {transform_indices = @transform_2, window_bounds = array<i64: 128, 1>}, {transform_indices = @transform_3, window_bounds = array<i64: 8, 32>}, {pipeline_mode = #tpu.pipeline_mode<synchronous>, transform_indices = @transform_4, window_bounds = array<i64: 48, 64>}, {pipeline_mode = #tpu.pipeline_mode<synchronous>, transform_indices = @transform_5, window_bounds = array<i64: 1, 64>}, {pipeline_mode = #tpu.pipeline_mode<synchronous>, transform_indices = @transform_6, window_bounds = array<i64: 32, 32>}, {pipeline_mode = #tpu.pipeline_mode<synchronous>, transform_indices = @transform_7, window_bounds = array<i64: 1, 32>}, {transform_indices = @transform_8, window_bounds = array<i64: 8, 32>}]} {
    %c0_i32 = arith.constant 0 : i32
    %0 = arith.cmpi eq, %arg1, %c0_i32 : i32
    %1 = arith.extui %0 : i1 to i32
    %c0_i32_0 = arith.constant 0 : i32
    %2 = arith.cmpi ne, %1, %c0_i32_0 : i32
    scf.if %2 {
      %cst = arith.constant 0.000000e+00 : f32
      %11 = vector.broadcast %cst : f32 to vector<8x32xf32>
      %c0 = arith.constant 0 : index
      %c0_3 = arith.constant 0 : index
      %12 = vector.load %arg13[%c0, %c0_3] : memref<8x32xf32, #tpu.memory_space<vmem>>, vector<8x32xf32>
      tpu.vector_store %arg13[%c0, %c0_3], %11 {strides = array<i32>} : memref<8x32xf32, #tpu.memory_space<vmem>>, vector<8x32xf32>,
      %cst_4 = arith.constant 0.000000e+00 : f32
      %13 = vector.broadcast %cst_4 : f32 to vector<8x1xf32>
      %c0_5 = arith.constant 0 : index
      %c0_6 = arith.constant 0 : index
      %14 = vector.load %arg14[%c0_5, %c0_6] : memref<8x1xf32, #tpu.memory_space<vmem>>, vector<8x1xf32>
      tpu.vector_store %arg14[%c0_5, %c0_6], %13 {strides = array<i32>} : memref<8x1xf32, #tpu.memory_space<vmem>>, vector<8x1xf32>,
    } else {
    }
    %3 = arith.index_cast %arg0 : i32 to index
    %4 = memref.load %arg3[%3] : memref<3xi32, #tpu.memory_space<smem>>
    %5 = arith.cmpi slt, %arg1, %4 : i32
    %6 = arith.extui %5 : i1 to i32
    %c0_i32_1 = arith.constant 0 : i32
    %7 = arith.cmpi ne, %6, %c0_i32_1 : i32
    scf.if %7 {
      %c0 = arith.constant 0 : index
      %c0_3 = arith.constant 0 : index
      %11 = vector.load %arg5[%c0, %c0_3] : memref<128x48xbf16, #tpu.memory_space<vmem>>, vector<128x48xbf16>
      %c0_4 = arith.constant 0 : index
      %c0_5 = arith.constant 0 : index
      %12 = vector.load %arg8[%c0_4, %c0_5] : memref<48x64xbf16, #tpu.memory_space<vmem>>, vector<48x64xbf16>
      %cst = arith.constant dense<0.000000e+00> : vector<128x64xf32>
      %13 = tpu.matmul %11, %12, %cst {dimension_numbers = #tpu.dot_dimension_numbers<[1], [0], [0], [1], [0, 0, 1, 1], [], []>} : vector<128x48xbf16>, vector<48x64xbf16>, vector<128x64xf32> -> vector<128x64xf32>
      %c0_6 = arith.constant 0 : index
      %c0_7 = arith.constant 0 : index
      %14 = vector.load %arg9[%c0_6, %c0_7] : memref<1x64xf32, #tpu.memory_space<vmem>>, vector<1x64xf32>
      %15 = vector.broadcast %14 : vector<1x64xf32> to vector<128x64xf32>
      %16 = arith.addf %13, %15 : vector<128x64xf32>
      %c0_8 = arith.constant 0 : index
      %c0_9 = arith.constant 0 : index
      %17 = vector.load %arg6[%c0_8, %c0_9] : memref<128x1xf32, #tpu.memory_space<vmem>>, vector<128x1xf32>
      %cst_10 = arith.constant 5.000000e-01 : f32
      %18 = vector.broadcast %cst_10 : f32 to vector<128x1xf32>
      %19 = arith.cmpf ogt, %17, %18 : vector<128x1xf32>
      %20 = vector.extract_strided_slice %16 {offsets = [0, 0], sizes = [128, 32], strides = [1, 1]} : vector<128x64xf32> to vector<128x32xf32>
      %21 = vector.extract_strided_slice %16 {offsets = [0, 32], sizes = [128, 32], strides = [1, 1]} : vector<128x64xf32> to vector<128x32xf32>
      %22 = vector.shape_cast %19 : vector<128x1xi1> to vector<128x1xi1>
      %23 = vector.broadcast %22 : vector<128x1xi1> to vector<128x32xi1>
      %24 = arith.select %23, %20, %21 : vector<128x32xi1>, vector<128x32xf32>
      %c8_i32 = arith.constant 8 : i32
      %25 = arith.muli %arg0, %c8_i32 : i32
      %26 = tpu.iota {dimensions = array<i32: 0>} : vector<8x128xi32>
      %27 = vector.broadcast %25 : i32 to vector<8x128xi32>
      %28 = arith.addi %27, %26 : vector<8x128xi32>
      %c0_11 = arith.constant 0 : index
      %c0_12 = arith.constant 0 : index
      %29 = vector.load %arg4[%c0_11, %c0_12] : memref<1x128xi32, #tpu.memory_space<vmem>>, vector<1x128xi32>
      %30 = vector.broadcast %29 : vector<1x128xi32> to vector<8x128xi32>
      %31 = arith.cmpi eq, %28, %30 : vector<8x128xi32>
      %c0_13 = arith.constant 0 : index
      %c0_14 = arith.constant 0 : index
      %32 = vector.load %arg13[%c0_13, %c0_14] : memref<8x32xf32, #tpu.memory_space<vmem>>, vector<8x32xf32>
      %33 = arith.extui %31 : vector<8x128xi1> to vector<8x128xi32>
      %34 = arith.sitofp %33 : vector<8x128xi32> to vector<8x128xf32>
      %35 = arith.truncf %34 : vector<8x128xf32> to vector<8x128xbf16>
      %36 = arith.truncf %24 : vector<128x32xf32> to vector<128x32xbf16>
      %cst_15 = arith.constant dense<0.000000e+00> : vector<8x32xf32>
      %37 = tpu.matmul %35, %36, %cst_15 {dimension_numbers = #tpu.dot_dimension_numbers<[1], [0], [0], [1], [0, 0, 1, 1], [], []>} : vector<8x128xbf16>, vector<128x32xbf16>, vector<8x32xf32> -> vector<8x32xf32>
      %38 = arith.addf %32, %37 : vector<8x32xf32>
      %c0_16 = arith.constant 0 : index
      %c0_17 = arith.constant 0 : index
      %39 = vector.load %arg13[%c0_16, %c0_17] : memref<8x32xf32, #tpu.memory_space<vmem>>, vector<8x32xf32>
      tpu.vector_store %arg13[%c0_16, %c0_17], %38 {strides = array<i32>} : memref<8x32xf32, #tpu.memory_space<vmem>>, vector<8x32xf32>,
      %c0_18 = arith.constant 0 : index
      %c0_19 = arith.constant 0 : index
      %40 = vector.load %arg14[%c0_18, %c0_19] : memref<8x1xf32, #tpu.memory_space<vmem>>, vector<8x1xf32>
      %41 = arith.extui %31 : vector<8x128xi1> to vector<8x128xi32>
      %42 = arith.sitofp %41 : vector<8x128xi32> to vector<8x128xf32>
      %cst_20 = arith.constant dense<0.000000e+00> : vector<8xf32>
      %43 = vector.multi_reduction <add>, %42, %cst_20 [1] : vector<8x128xf32> to vector<8xf32>
      %44 = vector.shape_cast %43 : vector<8xf32> to vector<8x1xf32>
      %45 = arith.addf %40, %44 : vector<8x1xf32>
      %c0_21 = arith.constant 0 : index
      %c0_22 = arith.constant 0 : index
      %46 = vector.load %arg14[%c0_21, %c0_22] : memref<8x1xf32, #tpu.memory_space<vmem>>, vector<8x1xf32>
      tpu.vector_store %arg14[%c0_21, %c0_22], %45 {strides = array<i32>} : memref<8x1xf32, #tpu.memory_space<vmem>>, vector<8x1xf32>,
    } else {
    }
    %c1_i32 = arith.constant 1 : i32
    %8 = arith.cmpi eq, %arg1, %c1_i32 : i32
    %9 = arith.extui %8 : i1 to i32
    %c0_i32_2 = arith.constant 0 : i32
    %10 = arith.cmpi ne, %9, %c0_i32_2 : i32
    scf.if %10 {
      %c0 = arith.constant 0 : index
      %c0_3 = arith.constant 0 : index
      %11 = vector.load %arg14[%c0, %c0_3] : memref<8x1xf32, #tpu.memory_space<vmem>>, vector<8x1xf32>
      %cst = arith.constant 0.000000e+00 : f32
      %12 = vector.broadcast %cst : f32 to vector<8x1xf32>
      %13 = arith.cmpf ogt, %11, %12 : vector<8x1xf32>
      %cst_4 = arith.constant 1.000000e+00 : f32
      %14 = vector.broadcast %cst_4 : f32 to vector<8x1xf32>
      %15 = arith.maximumf %11, %14 : vector<8x1xf32>
      %cst_5 = arith.constant 1.000000e+00 : f32
      %16 = vector.broadcast %cst_5 : f32 to vector<8x1xf32>
      %17 = arith.divf %16, %15 : vector<8x1xf32>
      %cst_6 = arith.constant 0.000000e+00 : f32
      %18 = vector.broadcast %cst_6 : f32 to vector<8x1xf32>
      %19 = arith.select %13, %17, %18 : vector<8x1xi1>, vector<8x1xf32>
      %c0_7 = arith.constant 0 : index
      %c0_8 = arith.constant 0 : index
      %20 = vector.load %arg7[%c0_7, %c0_8] : memref<8x32xf32, #tpu.memory_space<vmem>>, vector<8x32xf32>
      %c0_9 = arith.constant 0 : index
      %c0_10 = arith.constant 0 : index
      %21 = vector.load %arg10[%c0_9, %c0_10] : memref<32x32xf32, #tpu.memory_space<vmem>>, vector<32x32xf32>
      %cst_11 = arith.constant dense<0.000000e+00> : vector<8x32xf32>
      %22 = tpu.matmul %20, %21, %cst_11 {dimension_numbers = #tpu.dot_dimension_numbers<[1], [0], [0], [1], [0, 0, 1, 1], [], []>} : vector<8x32xf32>, vector<32x32xf32>, vector<8x32xf32> -> vector<8x32xf32>
      %c0_12 = arith.constant 0 : index
      %c0_13 = arith.constant 0 : index
      %23 = vector.load %arg11[%c0_12, %c0_13] : memref<1x32xf32, #tpu.memory_space<vmem>>, vector<1x32xf32>
      %24 = vector.broadcast %23 : vector<1x32xf32> to vector<8x32xf32>
      %25 = arith.addf %22, %24 : vector<8x32xf32>
      %c0_14 = arith.constant 0 : index
      %c0_15 = arith.constant 0 : index
      %26 = vector.load %arg13[%c0_14, %c0_15] : memref<8x32xf32, #tpu.memory_space<vmem>>, vector<8x32xf32>
      %27 = vector.broadcast %19 : vector<8x1xf32> to vector<8x32xf32>
      %28 = arith.mulf %26, %27 : vector<8x32xf32>
      %29 = arith.addf %25, %28 : vector<8x32xf32>
      %c0_16 = arith.constant 0 : index
      %c0_17 = arith.constant 0 : index
      %30 = vector.load %arg12[%c0_16, %c0_17] : memref<8x32xf32, #tpu.memory_space<vmem>>, vector<8x32xf32>
      tpu.vector_store %arg12[%c0_16, %c0_17], %29 {strides = array<i32>} : memref<8x32xf32, #tpu.memory_space<vmem>>, vector<8x32xf32>,
    } else {
    }
    return
  }
  func.func @transform_0(%arg0: i32, %arg1: i32, %arg2: memref<3xi32, #tpu.memory_space<smem>>, %arg3: memref<3xi32, #tpu.memory_space<smem>>) -> (i32, i32) {
    %0 = arith.index_cast %arg0 : i32 to index
    %1 = memref.load %arg3[%0] : memref<3xi32, #tpu.memory_space<smem>>
    %c1_i32 = arith.constant 1 : i32
    %2 = arith.subi %1, %c1_i32 : i32
    %c0_i32 = arith.constant 0 : i32
    %3 = arith.maxsi %2, %c0_i32 : i32
    %4 = arith.minsi %arg1, %3 : i32
    %5 = arith.index_cast %arg0 : i32 to index
    %6 = memref.load %arg2[%5] : memref<3xi32, #tpu.memory_space<smem>>
    %7 = arith.addi %6, %4 : i32
    %c2_i32 = arith.constant 2 : i32
    %8 = arith.minsi %7, %c2_i32 : i32
    %c0_i32_0 = arith.constant 0 : i32
    %c0_i32_1 = arith.constant 0 : i32
    return %c0_i32_0, %8 : i32, i32
  }
  func.func @transform_1(%arg0: i32, %arg1: i32, %arg2: memref<3xi32, #tpu.memory_space<smem>>, %arg3: memref<3xi32, #tpu.memory_space<smem>>) -> (i32, i32) {
    %0 = arith.index_cast %arg0 : i32 to index
    %1 = memref.load %arg3[%0] : memref<3xi32, #tpu.memory_space<smem>>
    %c1_i32 = arith.constant 1 : i32
    %2 = arith.subi %1, %c1_i32 : i32
    %c0_i32 = arith.constant 0 : i32
    %3 = arith.maxsi %2, %c0_i32 : i32
    %4 = arith.minsi %arg1, %3 : i32
    %5 = arith.index_cast %arg0 : i32 to index
    %6 = memref.load %arg2[%5] : memref<3xi32, #tpu.memory_space<smem>>
    %7 = arith.addi %6, %4 : i32
    %c2_i32 = arith.constant 2 : i32
    %8 = arith.minsi %7, %c2_i32 : i32
    %c0_i32_0 = arith.constant 0 : i32
    %c0_i32_1 = arith.constant 0 : i32
    return %8, %c0_i32_0 : i32, i32
  }
  func.func @transform_2(%arg0: i32, %arg1: i32, %arg2: memref<3xi32, #tpu.memory_space<smem>>, %arg3: memref<3xi32, #tpu.memory_space<smem>>) -> (i32, i32) {
    %0 = arith.index_cast %arg0 : i32 to index
    %1 = memref.load %arg3[%0] : memref<3xi32, #tpu.memory_space<smem>>
    %c1_i32 = arith.constant 1 : i32
    %2 = arith.subi %1, %c1_i32 : i32
    %c0_i32 = arith.constant 0 : i32
    %3 = arith.maxsi %2, %c0_i32 : i32
    %4 = arith.minsi %arg1, %3 : i32
    %5 = arith.index_cast %arg0 : i32 to index
    %6 = memref.load %arg2[%5] : memref<3xi32, #tpu.memory_space<smem>>
    %7 = arith.addi %6, %4 : i32
    %c2_i32 = arith.constant 2 : i32
    %8 = arith.minsi %7, %c2_i32 : i32
    %c0_i32_0 = arith.constant 0 : i32
    %c0_i32_1 = arith.constant 0 : i32
    return %8, %c0_i32_0 : i32, i32
  }
  func.func @transform_3(%arg0: i32, %arg1: i32, %arg2: memref<3xi32, #tpu.memory_space<smem>>, %arg3: memref<3xi32, #tpu.memory_space<smem>>) -> (i32, i32) {
    %c0_i32 = arith.constant 0 : i32
    %c0_i32_0 = arith.constant 0 : i32
    return %arg0, %c0_i32 : i32, i32
  }
  func.func @transform_4(%arg0: i32, %arg1: i32, %arg2: memref<3xi32, #tpu.memory_space<smem>>, %arg3: memref<3xi32, #tpu.memory_space<smem>>) -> (i32, i32) {
    %c0_i32 = arith.constant 0 : i32
    %c0_i32_0 = arith.constant 0 : i32
    %c0_i32_1 = arith.constant 0 : i32
    return %c0_i32, %c0_i32_0 : i32, i32
  }
  func.func @transform_5(%arg0: i32, %arg1: i32, %arg2: memref<3xi32, #tpu.memory_space<smem>>, %arg3: memref<3xi32, #tpu.memory_space<smem>>) -> (i32, i32) {
    %c0_i32 = arith.constant 0 : i32
    %c0_i32_0 = arith.constant 0 : i32
    %c0_i32_1 = arith.constant 0 : i32
    return %c0_i32, %c0_i32_0 : i32, i32
  }
  func.func @transform_6(%arg0: i32, %arg1: i32, %arg2: memref<3xi32, #tpu.memory_space<smem>>, %arg3: memref<3xi32, #tpu.memory_space<smem>>) -> (i32, i32) {
    %c0_i32 = arith.constant 0 : i32
    %c0_i32_0 = arith.constant 0 : i32
    %c0_i32_1 = arith.constant 0 : i32
    return %c0_i32, %c0_i32_0 : i32, i32
  }
  func.func @transform_7(%arg0: i32, %arg1: i32, %arg2: memref<3xi32, #tpu.memory_space<smem>>, %arg3: memref<3xi32, #tpu.memory_space<smem>>) -> (i32, i32) {
    %c0_i32 = arith.constant 0 : i32
    %c0_i32_0 = arith.constant 0 : i32
    %c0_i32_1 = arith.constant 0 : i32
    return %c0_i32, %c0_i32_0 : i32, i32
  }
  func.func @transform_8(%arg0: i32, %arg1: i32, %arg2: memref<3xi32, #tpu.memory_space<smem>>, %arg3: memref<3xi32, #tpu.memory_space<smem>>) -> (i32, i32) {
    %c0_i32 = arith.constant 0 : i32
    %c0_i32_0 = arith.constant 0 : i32
    return %arg0, %c0_i32 : i32, i32
  }
}

</mosaic_0001>

<llo_original>
// kernel: tpu_custom_call.1
$region0: #{tpu_custom_call.1}
  #allocation0 [shape = 'u32[]', space=smem, size = 0x4, offset = 0x4, fixed_abs, tag = 'smem constant byte address 0x4 - core index']
  #allocation1 [shape = 'u32[72,128]{1,0:T(1,128)}', space=vmem, size = 0x9000, scoped, tag = 'internal scratch']
  #allocation2 [shape = 'f32[8,32]{1,0:T(8,128)}', space=vmem, size = 0x1000, scoped, tag = 'scratch operand']
  #allocation3 [shape = 'f32[8,1]{1,0:T(8,128)}', space=vmem, size = 0x1000, scoped, tag = 'scratch operand']
  #allocation4 [shape = 's32[1]{0}', space=sflag, size = 0x4, scoped, tag = 'scoped memory for tpu_custom_call.1']
  #allocation5 [shape = 'u8[512]{0}', space=smem, size = 0x200, scoped, tag = 'prefetched SMEM operand 0']
  #allocation6 [shape = 'u8[512]{0}', space=smem, size = 0x200, scoped, tag = 'prefetched SMEM operand 1']
  %s0 = inlined_call_operand.vmem [shape: s32[3], index: 0, kind: input, shape index: {}]
  %s1 = inlined_call_operand.vmem [shape: s32[3], index: 1, kind: input, shape index: {}]
  %s2 = inlined_call_operand.vmem [shape: s32[1,384], index: 2, kind: input, shape index: {}]
  %s3 = inlined_call_operand.vmem [shape: bf16[384,48], index: 3, kind: input, shape index: {}]
  %s4 = inlined_call_operand.vmem [shape: f32[384,1], index: 4, kind: input, shape index: {}]
  %s5 = inlined_call_operand.vmem [shape: f32[24,32], index: 5, kind: input, shape index: {}]
  %s6 = inlined_call_operand.vmem [shape: bf16[48,64], index: 6, kind: input, shape index: {}]
  %s7 = inlined_call_operand.vmem [shape: f32[1,64], index: 7, kind: input, shape index: {}]
  %s8 = inlined_call_operand.vmem [shape: f32[32,32], index: 8, kind: input, shape index: {}]
  %s9 = inlined_call_operand.vmem [shape: f32[1,32], index: 9, kind: input, shape index: {}]
  %s10 = inlined_call_operand.hbm [shape: f32[24,32], index: 10, kind: output, shape index: {}]
  %s11 = sld [smem:[#allocation0]]
  $region77: #{tpu_custom_call.1} parent=0
    _
  %s13 = ssub.s32 1, %s11
  %s14 = scalar_select 0, %s13, %s11
  %s16 = sshll.u32 %s0, 4
  %s17 = int_to_ptr.vmem [resolvable:$true] %s16
  %19 = dma.vmem_to_smem %s17, 16, [#allocation5], [#allocation4]
  %s21 = sshll.u32 %s1, 4
  %s22 = int_to_ptr.vmem [resolvable:$true] %s21
  %24 = dma.vmem_to_smem %s22, 16, [#allocation6], [#allocation4]
  %26 = dma.done [#allocation4], 32
  %27 = sfence
  $region1: #{tpu_custom_call.1} parent=0
    #allocation7 [shape = 'u8[8192]{0}', space=vmem, size = 0x2000, scoped, tag = 'output window, operand 0']
    #allocation8 [shape = 's32[2]{0}', space=sflag, size = 0x8, scoped, tag = 'scoped memory for tpu_custom_call.1']
    %28 = vsyncpa [#allocation8], 0
    %s29 = scalar_lea.sflag [#allocation8], 1
    %30 = vsyncpa %s29, 0
    loop: start=0, step=1, limit=8
    $region2: #{tpu_custom_call.1} parent=1 // loop_pre_header
      _
    $region3: #{tpu_custom_call.1} parent=1 // loop_header
      %s32 = sphi 0, %s36
      %p33 = scmp.ge.s32.totalorder %s32, 8
      %s39 = sphi 0, %s51
      %s40 = sphi 0, %s47
      %s41 = sphi 0, %s39
      %s42 = sphi 0, %s40
      %s43 = sphi 0, %s41
      %s44 = sphi 0, %s42
      %s74 = sphi 0, %s76
      %s77 = sphi 0, %s74
      %s78 = sphi 0, %s77
      %s94 = sphi 0, %s78
      %s120 = sphi 0, %s122
      %s123 = sphi 0, %s120
      %s124 = sphi 0, %s123
      %s140 = sphi 0, %s124
      %s166 = sphi 0, %s168
      %s169 = sphi 0, %s166
      %s170 = sphi 0, %s169
      %s186 = sphi 0, %s170
      %s192 = sphi 0, %s194
      %s195 = sphi 0, %s192
      %s196 = sphi 0, %s195
      %s212 = sphi 0, %s196
      %s216 = sphi 0, %s216
      %s218 = sphi 0, %s216
      %s219 = sphi 0, %s218
      %s233 = sphi 0, %s219
      %s237 = sphi 0, %s237
      %s239 = sphi 0, %s237
      %s240 = sphi 0, %s239
      %s254 = sphi 0, %s240
      %s258 = sphi 0, %s258
      %s260 = sphi 0, %s258
      %s261 = sphi 0, %s260
      %s275 = sphi 0, %s261
      %s279 = sphi 0, %s279
      %s281 = sphi 0, %s279
      %s282 = sphi 0, %s281
      %s296 = sphi 0, %s282
      %s302 = sphi 0, %s304
      %s305 = sphi 0, %s302
      %s306 = sphi 0, %s305
      %s322 = sphi 0, %s306
    $region4: #{tpu_custom_call.1} parent=1 // loop_header_branch
      %35 = sbr.rel (%p33) target = $region8
    $region5: #{tpu_custom_call.1} parent=1 // loop_body
      %s37 = ssub.s32 %s32, 1
      %s38 = ssub.s32 %s32, 2
      %s45 = sadd.s32 1, %s40
      %p46 = scmp.ge.s32.totalorder %s45, 2
      %s47 = scalar_select %p46, 0, %s45
      %s48 = sadd.s32 1, %s39
      %s49 = scalar_select %p46, %s48, %s39
      %p50 = scmp.ge.s32.totalorder %s49, 3
      %s51 = scalar_select %p50, 0, %s49
      %s52 = sld [smem:[#allocation6 + %s39]]
      %s53 = ssub.s32 %s52, 1
      %p54 = scmp.gt.s32.totalorder %s53, 0
      %s55 = scalar_select %p54, %s53, 0
      %p56 = scmp.lt.s32.totalorder %s40, %s55
      %s57 = scalar_select %p56, %s40, %s55
      %s58 = sld [smem:[#allocation5 + %s39]]
      %s59 = sadd.s32 %s58, %s57
      %p60 = scmp.lt.s32.totalorder %s59, 2
      %s61 = scalar_select %p60, %s59, 2
      %s62 = sld [smem:[#allocation6 + %s51]]
      %s63 = ssub.s32 %s62, 1
      %p64 = scmp.gt.s32.totalorder %s63, 0
      %s65 = scalar_select %p64, %s63, 0
      %p66 = scmp.lt.s32.totalorder %s47, %s65
      %s67 = scalar_select %p66, %s47, %s65
      %s68 = sld [smem:[#allocation5 + %s51]]
      %s69 = sadd.s32 %s68, %s67
      %p70 = scmp.lt.s32.totalorder %s69, 2
      %s71 = scalar_select %p70, %s69, 2
      %s72 = ssub.s32 %s61, %s71
      %p73 = scmp.eq.s32.totalorder %s72, 0
      %s75 = sadd.s32 %s74, 1
      %s76 = scalar_select %p73, %s74, %s75
      %p79 = pneg %p73
      %p80 = scmp.eq.s32.totalorder %s32, 5
      %p81 = por %p79, %p80
      %p82 = scmp.ne.s32.totalorder %s74, %s77
      %p83 = scmp.eq.s32.totalorder %s32, 0
      %p84 = por %p82, %p83
      %p85 = scmp.ne.s32.totalorder %s74, %s77
      %p86 = scmp.eq.s32.totalorder %s37, 5
      %p87 = por %p85, %p86
      %p88 = scmp.ne.s32.totalorder %s77, %s78
      %p89 = scmp.eq.s32.totalorder %s37, 0
      %p90 = por %p88, %p89
      %p91 = scmp.ne.s32.totalorder %s77, %s78
      %p92 = scmp.eq.s32.totalorder %s38, 5
      %p93 = por %p91, %p92
      %p95 = scmp.ne.s32.totalorder %s78, %s94
      %p96 = scmp.eq.s32.totalorder %s38, 0
      %p97 = por %p95, %p96
      %s98 = sld [smem:[#allocation6 + %s39]]
      %s99 = ssub.s32 %s98, 1
      %p100 = scmp.gt.s32.totalorder %s99, 0
      %s101 = scalar_select %p100, %s99, 0
      %p102 = scmp.lt.s32.totalorder %s40, %s101
      %s103 = scalar_select %p102, %s40, %s101
      %s104 = sld [smem:[#allocation5 + %s39]]
      %s105 = sadd.s32 %s104, %s103
      %p106 = scmp.lt.s32.totalorder %s105, 2
      %s107 = scalar_select %p106, %s105, 2
      %s108 = sld [smem:[#allocation6 + %s51]]
      %s109 = ssub.s32 %s108, 1
      %p110 = scmp.gt.s32.totalorder %s109, 0
      %s111 = scalar_select %p110, %s109, 0
      %p112 = scmp.lt.s32.totalorder %s47, %s111
      %s113 = scalar_select %p112, %s47, %s111
      %s114 = sld [smem:[#allocation5 + %s51]]
      %s115 = sadd.s32 %s114, %s113
      %p116 = scmp.lt.s32.totalorder %s115, 2
      %s117 = scalar_select %p116, %s115, 2
      %s118 = ssub.s32 %s107, %s117
      %p119 = scmp.eq.s32.totalorder %s118, 0
      %s121 = sadd.s32 %s120, 1
      %s122 = scalar_select %p119, %s120, %s121
      %p125 = pneg %p119
      %p126 = scmp.eq.s32.totalorder %s32, 5
      %p127 = por %p125, %p126
      %p128 = scmp.ne.s32.totalorder %s120, %s123
      %p129 = scmp.eq.s32.totalorder %s32, 0
      %p130 = por %p128, %p129
      %p131 = scmp.ne.s32.totalorder %s120, %s123
      %p132 = scmp.eq.s32.totalorder %s37, 5
      %p133 = por %p131, %p132
      %p134 = scmp.ne.s32.totalorder %s123, %s124
      %p135 = scmp.eq.s32.totalorder %s37, 0
      %p136 = por %p134, %p135
      %p137 = scmp.ne.s32.totalorder %s123, %s124
      %p138 = scmp.eq.s32.totalorder %s38, 5
      %p139 = por %p137, %p138
      %p141 = scmp.ne.s32.totalorder %s124, %s140
      %p142 = scmp.eq.s32.totalorder %s38, 0
      %p143 = por %p141, %p142
      %s144 = sld [smem:[#allocation6 + %s39]]
      %s145 = ssub.s32 %s144, 1
      %p146 = scmp.gt.s32.totalorder %s145, 0
      %s147 = scalar_select %p146, %s145, 0
      %p148 = scmp.lt.s32.totalorder %s40, %s147
      %s149 = scalar_select %p148, %s40, %s147
      %s150 = sld [smem:[#allocation5 + %s39]]
      %s151 = sadd.s32 %s150, %s149
      %p152 = scmp.lt.s32.totalorder %s151, 2
      %s153 = scalar_select %p152, %s151, 2
      %s154 = sld [smem:[#allocation6 + %s51]]
      %s155 = ssub.s32 %s154, 1
      %p156 = scmp.gt.s32.totalorder %s155, 0
      %s157 = scalar_select %p156, %s155, 0
      %p158 = scmp.lt.s32.totalorder %s47, %s157
      %s159 = scalar_select %p158, %s47, %s157
      %s160 = sld [smem:[#allocation5 + %s51]]
      %s161 = sadd.s32 %s160, %s159
      %p162 = scmp.lt.s32.totalorder %s161, 2
      %s163 = scalar_select %p162, %s161, 2
      %s164 = ssub.s32 %s153, %s163
      %p165 = scmp.eq.s32.totalorder %s164, 0
      %s167 = sadd.s32 %s166, 1
      %s168 = scalar_select %p165, %s166, %s167
      %p171 = pneg %p165
      %p172 = scmp.eq.s32.totalorder %s32, 5
      %p173 = por %p171, %p172
      %p174 = scmp.ne.s32.totalorder %s166, %s169
      %p175 = scmp.eq.s32.totalorder %s32, 0
      %p176 = por %p174, %p175
      %p177 = scmp.ne.s32.totalorder %s166, %s169
      %p178 = scmp.eq.s32.totalorder %s37, 5
      %p179 = por %p177, %p178
      %p180 = scmp.ne.s32.totalorder %s169, %s170
      %p181 = scmp.eq.s32.totalorder %s37, 0
      %p182 = por %p180, %p181
      %p183 = scmp.ne.s32.totalorder %s169, %s170
      %p184 = scmp.eq.s32.totalorder %s38, 5
      %p185 = por %p183, %p184
      %p187 = scmp.ne.s32.totalorder %s170, %s186
      %p188 = scmp.eq.s32.totalorder %s38, 0
      %p189 = por %p187, %p188
      %s190 = ssub.s32 %s39, %s51
      %p191 = scmp.eq.s32.totalorder %s190, 0
      %s193 = sadd.s32 %s192, 1
      %s194 = scalar_select %p191, %s192, %s193
      %p197 = pneg %p191
      %p198 = scmp.eq.s32.totalorder %s32, 5
      %p199 = por %p197, %p198
      %p200 = scmp.ne.s32.totalorder %s192, %s195
      %p201 = scmp.eq.s32.totalorder %s32, 0
      %p202 = por %p200, %p201
      %p203 = scmp.ne.s32.totalorder %s192, %s195
      %p204 = scmp.eq.s32.totalorder %s37, 5
      %p205 = por %p203, %p204
      %p206 = scmp.ne.s32.totalorder %s195, %s196
      %p207 = scmp.eq.s32.totalorder %s37, 0
      %p208 = por %p206, %p207
      %p209 = scmp.ne.s32.totalorder %s195, %s196
      %p210 = scmp.eq.s32.totalorder %s38, 5
      %p211 = por %p209, %p210
      %p213 = scmp.ne.s32.totalorder %s196, %s212
      %p214 = scmp.eq.s32.totalorder %s38, 0
      %p215 = por %p213, %p214
      %s217 = sadd.s32 %s216, 1
      %p220 = scmp.eq.s32.totalorder %s32, 5
      %p221 = scmp.ne.s32.totalorder %s216, %s218
      %p222 = scmp.eq.s32.totalorder %s32, 0
      %p223 = por %p221, %p222
      %p224 = scmp.ne.s32.totalorder %s216, %s218
      %p225 = scmp.eq.s32.totalorder %s37, 5
      %p226 = por %p224, %p225
      %p227 = scmp.ne.s32.totalorder %s218, %s219
      %p228 = scmp.eq.s32.totalorder %s37, 0
      %p229 = por %p227, %p228
      %p230 = scmp.ne.s32.totalorder %s218, %s219
      %p231 = scmp.eq.s32.totalorder %s38, 5
      %p232 = por %p230, %p231
      %p234 = scmp.ne.s32.totalorder %s219, %s233
      %p235 = scmp.eq.s32.totalorder %s38, 0
      %p236 = por %p234, %p235
      %s238 = sadd.s32 %s237, 1
      %p241 = scmp.eq.s32.totalorder %s32, 5
      %p242 = scmp.ne.s32.totalorder %s237, %s239
      %p243 = scmp.eq.s32.totalorder %s32, 0
      %p244 = por %p242, %p243
      %p245 = scmp.ne.s32.totalorder %s237, %s239
      %p246 = scmp.eq.s32.totalorder %s37, 5
      %p247 = por %p245, %p246
      %p248 = scmp.ne.s32.totalorder %s239, %s240
      %p249 = scmp.eq.s32.totalorder %s37, 0
      %p250 = por %p248, %p249
      %p251 = scmp.ne.s32.totalorder %s239, %s240
      %p252 = scmp.eq.s32.totalorder %s38, 5
      %p253 = por %p251, %p252
      %p255 = scmp.ne.s32.totalorder %s240, %s254
      %p256 = scmp.eq.s32.totalorder %s38, 0
      %p257 = por %p255, %p256
      %s259 = sadd.s32 %s258, 1
      %p262 = scmp.eq.s32.totalorder %s32, 5
      %p263 = scmp.ne.s32.totalorder %s258, %s260
      %p264 = scmp.eq.s32.totalorder %s32, 0
      %p265 = por %p263, %p264
      %p266 = scmp.ne.s32.totalorder %s258, %s260
      %p267 = scmp.eq.s32.totalorder %s37, 5
      %p268 = por %p266, %p267
      %p269 = scmp.ne.s32.totalorder %s260, %s261
      %p270 = scmp.eq.s32.totalorder %s37, 0
      %p271 = por %p269, %p270
      %p272 = scmp.ne.s32.totalorder %s260, %s261
      %p273 = scmp.eq.s32.totalorder %s38, 5
      %p274 = por %p272, %p273
      %p276 = scmp.ne.s32.totalorder %s261, %s275
      %p277 = scmp.eq.s32.totalorder %s38, 0
      %p278 = por %p276, %p277
      %s280 = sadd.s32 %s279, 1
      %p283 = scmp.eq.s32.totalorder %s32, 5
      %p284 = scmp.ne.s32.totalorder %s279, %s281
      %p285 = scmp.eq.s32.totalorder %s32, 0
      %p286 = por %p284, %p285
      %p287 = scmp.ne.s32.totalorder %s279, %s281
      %p288 = scmp.eq.s32.totalorder %s37, 5
      %p289 = por %p287, %p288
      %p290 = scmp.ne.s32.totalorder %s281, %s282
      %p291 = scmp.eq.s32.totalorder %s37, 0
      %p292 = por %p290, %p291
      %p293 = scmp.ne.s32.totalorder %s281, %s282
      %p294 = scmp.eq.s32.totalorder %s38, 5
      %p295 = por %p293, %p294
      %p297 = scmp.ne.s32.totalorder %s282, %s296
      %p298 = scmp.eq.s32.totalorder %s38, 0
      %p299 = por %p297, %p298
      %s300 = ssub.s32 %s39, %s51
      %p301 = scmp.eq.s32.totalorder %s300, 0
      %s303 = sadd.s32 %s302, 1
      %s304 = scalar_select %p301, %s302, %s303
      %p307 = pneg %p301
      %p308 = scmp.eq.s32.totalorder %s32, 5
      %p309 = por %p307, %p308
      %p310 = scmp.ne.s32.totalorder %s302, %s305
      %p311 = scmp.eq.s32.totalorder %s32, 0
      %p312 = por %p310, %p311
      %p313 = scmp.ne.s32.totalorder %s302, %s305
      %p314 = scmp.eq.s32.totalorder %s37, 5
      %p315 = por %p313, %p314
      %p316 = scmp.ne.s32.totalorder %s305, %s306
      %p317 = scmp.eq.s32.totalorder %s37, 0
      %p318 = por %p316, %p317
      %p319 = scmp.ne.s32.totalorder %s305, %s306
      %p320 = scmp.eq.s32.totalorder %s38, 5
      %p321 = por %p319, %p320
      %p323 = scmp.ne.s32.totalorder %s306, %s322
      %p324 = scmp.eq.s32.totalorder %s38, 0
      %p325 = por %p323, %p324
      %p326 = scmp.le.s32.totalorder 1, %s32
      %p327 = scmp.lt.s32.totalorder %s32, 7
      %p328 = pnand %p326, %p327
      %p329 = pneg %p328
      // Predicated region
      $region9: #{tpu_custom_call.1} parent=5 // pred_check
        _
      $region10: #{tpu_custom_call.1} parent=5 // pred_check_branch
        %331 = sbr.rel (%p328) target = $region12
      $region11: #{tpu_custom_call.1} parent=5 // pred_region
        %s332 = ssub.s32 %s32, 1
        // Predicated region
        $region13: #{tpu_custom_call.1} parent=11 // pred_check
          %p333 = pneg %p229
        $region14: #{tpu_custom_call.1} parent=11 // pred_check_branch
          %335 = sbr.rel (%p333) target = $region16
        $region15: #{tpu_custom_call.1} parent=11 // pred_region
          _
        $region16: #{tpu_custom_call.1} parent=11 // pred_fallthru
          _
        // Predicated region
        $region17: #{tpu_custom_call.1} parent=11 // pred_check
          %p336 = pneg %p250
        $region18: #{tpu_custom_call.1} parent=11 // pred_check_branch
          %338 = sbr.rel (%p336) target = $region20
        $region19: #{tpu_custom_call.1} parent=11 // pred_region
          _
        $region20: #{tpu_custom_call.1} parent=11 // pred_fallthru
          _
        // Predicated region
        $region21: #{tpu_custom_call.1} parent=11 // pred_check
          %p339 = pneg %p271
        $region22: #{tpu_custom_call.1} parent=11 // pred_check_branch
          %341 = sbr.rel (%p339) target = $region24
        $region23: #{tpu_custom_call.1} parent=11 // pred_region
          _
        $region24: #{tpu_custom_call.1} parent=11 // pred_fallthru
          _
        // Predicated region
        $region25: #{tpu_custom_call.1} parent=11 // pred_check
          %p342 = pneg %p292
        $region26: #{tpu_custom_call.1} parent=11 // pred_check_branch
          %344 = sbr.rel (%p342) target = $region28
        $region27: #{tpu_custom_call.1} parent=11 // pred_region
          _
        $region28: #{tpu_custom_call.1} parent=11 // pred_fallthru
          _
      $region12: #{tpu_custom_call.1} parent=5 // pred_fallthru
        _
      %p345 = scmp.lt.s32.totalorder %s32, 6
      // Predicated region
      $region29: #{tpu_custom_call.1} parent=5 // pred_check
        %p346 = pneg %p345
      $region30: #{tpu_custom_call.1} parent=5 // pred_check_branch
        %348 = sbr.rel (%p346) target = $region32
      $region31: #{tpu_custom_call.1} parent=5 // pred_region
        // Predicated region
        $region33: #{tpu_custom_call.1} parent=31 // pred_check
          %p349 = pneg %p84
        $region34: #{tpu_custom_call.1} parent=31 // pred_check_branch
          %351 = sbr.rel (%p349) target = $region36
        $region35: #{tpu_custom_call.1} parent=31 // pred_region
          %s352 = sld [smem:[#allocation6 + %s39]]
          %s353 = ssub.s32 %s352, 1
          %p354 = scmp.gt.s32.totalorder %s353, 0
          %s355 = scalar_select %p354, %s353, 0
          %p356 = scmp.lt.s32.totalorder %s40, %s355
          %s357 = scalar_select %p356, %s40, %s355
          %s358 = sld [smem:[#allocation5 + %s39]]
          %s359 = sadd.s32 %s358, %s357
          %p360 = scmp.lt.s32.totalorder %s359, 2
          %s361 = scalar_select %p360, %s359, 2
          %p362 = scmp.lt.s32.totalorder %s361, 2
          %s363 = scalar_select %p362, %s361, 2
          %s364 = scalar_lea.vmem %s2, %s363
          %s365 = sld [smem:[#allocation6 + %s39]]
          %s366 = ssub.s32 %s365, 1
          %p367 = scmp.gt.s32.totalorder %s366, 0
          %s368 = scalar_select %p367, %s366, 0
          %p369 = scmp.lt.s32.totalorder %s40, %s368
          %s370 = scalar_select %p369, %s40, %s368
          %s371 = sld [smem:[#allocation5 + %s39]]
          %s372 = sadd.s32 %s371, %s370
          %p373 = scmp.lt.s32.totalorder %s372, 2
          %s374 = scalar_select %p373, %s372, 2
        $region36: #{tpu_custom_call.1} parent=31 // pred_fallthru
          _
        // Predicated region
        $region37: #{tpu_custom_call.1} parent=31 // pred_check
          %p375 = pneg %p130
        $region38: #{tpu_custom_call.1} parent=31 // pred_check_branch
          %377 = sbr.rel (%p375) target = $region40
        $region39: #{tpu_custom_call.1} parent=31 // pred_region
          %s378 = sld [smem:[#allocation6 + %s39]]
          %s379 = ssub.s32 %s378, 1
          %p380 = scmp.gt.s32.totalorder %s379, 0
          %s381 = scalar_select %p380, %s379, 0
          %p382 = scmp.lt.s32.totalorder %s40, %s381
          %s383 = scalar_select %p382, %s40, %s381
          %s384 = sld [smem:[#allocation5 + %s39]]
          %s385 = sadd.s32 %s384, %s383
          %p386 = scmp.lt.s32.totalorder %s385, 2
          %s387 = scalar_select %p386, %s385, 2
          %s388 = smul.u32 16, %s387
          %p389 = scmp.lt.s32.totalorder %s388, 47
          %s390 = scalar_select %p389, %s388, 47
          %s391 = smul.addr %s390, 4
          %s392 = scalar_lea.vmem %s3, %s391
          %s393 = sld [smem:[#allocation6 + %s39]]
          %s394 = ssub.s32 %s393, 1
          %p395 = scmp.gt.s32.totalorder %s394, 0
          %s396 = scalar_select %p395, %s394, 0
          %p397 = scmp.lt.s32.totalorder %s40, %s396
          %s398 = scalar_select %p397, %s40, %s396
          %s399 = sld [smem:[#allocation5 + %s39]]
          %s400 = sadd.s32 %s399, %s398
          %p401 = scmp.lt.s32.totalorder %s400, 2
          %s402 = scalar_select %p401, %s400, 2
          %s403 = smul.u32 16, %s402
        $region40: #{tpu_custom_call.1} parent=31 // pred_fallthru
          _
        // Predicated region
        $region41: #{tpu_custom_call.1} parent=31 // pred_check
          %p404 = pneg %p176
        $region42: #{tpu_custom_call.1} parent=31 // pred_check_branch
          %406 = sbr.rel (%p404) target = $region44
        $region43: #{tpu_custom_call.1} parent=31 // pred_region
          %s407 = sld [smem:[#allocation6 + %s39]]
          %s408 = ssub.s32 %s407, 1
          %p409 = scmp.gt.s32.totalorder %s408, 0
          %s410 = scalar_select %p409, %s408, 0
          %p411 = scmp.lt.s32.totalorder %s40, %s410
          %s412 = scalar_select %p411, %s40, %s410
          %s413 = sld [smem:[#allocation5 + %s39]]
          %s414 = sadd.s32 %s413, %s412
          %p415 = scmp.lt.s32.totalorder %s414, 2
          %s416 = scalar_select %p415, %s414, 2
          %s417 = smul.u32 16, %s416
          %p418 = scmp.lt.s32.totalorder %s417, 47
          %s419 = scalar_select %p418, %s417, 47
          %s420 = smul.addr %s419, 8
          %s421 = scalar_lea.vmem %s4, %s420
          %s422 = sld [smem:[#allocation6 + %s39]]
          %s423 = ssub.s32 %s422, 1
          %p424 = scmp.gt.s32.totalorder %s423, 0
          %s425 = scalar_select %p424, %s423, 0
          %p426 = scmp.lt.s32.totalorder %s40, %s425
          %s427 = scalar_select %p426, %s40, %s425
          %s428 = sld [smem:[#allocation5 + %s39]]
          %s429 = sadd.s32 %s428, %s427
          %p430 = scmp.lt.s32.totalorder %s429, 2
          %s431 = scalar_select %p430, %s429, 2
          %s432 = smul.u32 16, %s431
        $region44: #{tpu_custom_call.1} parent=31 // pred_fallthru
          _
        // Predicated region
        $region45: #{tpu_custom_call.1} parent=31 // pred_check
          %p433 = pneg %p202
        $region46: #{tpu_custom_call.1} parent=31 // pred_check_branch
          %435 = sbr.rel (%p433) target = $region48
        $region47: #{tpu_custom_call.1} parent=31 // pred_region
          %p436 = scmp.lt.s32.totalorder %s39, 2
          %s437 = scalar_select %p436, %s39, 2
          %s438 = smul.addr %s437, 8
          %s439 = scalar_lea.vmem %s5, %s438
        $region48: #{tpu_custom_call.1} parent=31 // pred_fallthru
          _
      $region32: #{tpu_custom_call.1} parent=5 // pred_fallthru
        _
      %p440 = scmp.le.s32.totalorder 1, %s32
      %p441 = scmp.lt.s32.totalorder %s32, 7
      %p442 = pnand %p440, %p441
      %p443 = pneg %p442
      // Predicated region
      $region49: #{tpu_custom_call.1} parent=5 // pred_check
        _
      $region50: #{tpu_custom_call.1} parent=5 // pred_check_branch
        %445 = sbr.rel (%p442) target = $region52
      $region51: #{tpu_custom_call.1} parent=5 // pred_region
        %s446 = ssub.s32 %s32, 1
        %s447 = sld [smem:[#allocation6 + %s41]]
        %s448 = ssub.s32 %s447, 1
        %p449 = scmp.gt.s32.totalorder %s448, 0
        %s450 = scalar_select %p449, %s448, 0
        %p451 = scmp.lt.s32.totalorder %s42, %s450
        %s452 = scalar_select %p451, %s42, %s450
        %s453 = sld [smem:[#allocation5 + %s41]]
        %s454 = sadd.s32 %s453, %s452
        %p455 = scmp.lt.s32.totalorder %s454, 2
        %s456 = scalar_select %p455, %s454, 2
        %p457 = scmp.lt.s32.totalorder %s456, 2
        %s458 = scalar_select %p457, %s456, 2
        %s459 = scalar_lea.vmem %s2, %s458
        %p460 = pneg %p90
        %p461 = pneg %p87
        %s462 = sld [smem:[#allocation6 + %s41]]
        %s463 = ssub.s32 %s462, 1
        %p464 = scmp.gt.s32.totalorder %s463, 0
        %s465 = scalar_select %p464, %s463, 0
        %p466 = scmp.lt.s32.totalorder %s42, %s465
        %s467 = scalar_select %p466, %s42, %s465
        %s468 = sld [smem:[#allocation5 + %s41]]
        %s469 = sadd.s32 %s468, %s467
        %p470 = scmp.lt.s32.totalorder %s469, 2
        %s471 = scalar_select %p470, %s469, 2
        %s472 = smul.u32 16, %s471
        %p473 = scmp.lt.s32.totalorder %s472, 47
        %s474 = scalar_select %p473, %s472, 47
        %s475 = smul.addr %s474, 4
        %s476 = scalar_lea.vmem %s3, %s475
        %p477 = pneg %p136
        %p478 = pneg %p133
        %s479 = sld [smem:[#allocation6 + %s41]]
        %s480 = ssub.s32 %s479, 1
        %p481 = scmp.gt.s32.totalorder %s480, 0
        %s482 = scalar_select %p481, %s480, 0
        %p483 = scmp.lt.s32.totalorder %s42, %s482
        %s484 = scalar_select %p483, %s42, %s482
        %s485 = sld [smem:[#allocation5 + %s41]]
        %s486 = sadd.s32 %s485, %s484
        %p487 = scmp.lt.s32.totalorder %s486, 2
        %s488 = scalar_select %p487, %s486, 2
        %s489 = smul.u32 16, %s488
        %p490 = scmp.lt.s32.totalorder %s489, 47
        %s491 = scalar_select %p490, %s489, 47
        %s492 = smul.addr %s491, 8
        %s493 = scalar_lea.vmem %s4, %s492
        %p494 = pneg %p182
        %p495 = pneg %p179
        %p496 = scmp.lt.s32.totalorder %s41, 2
        %s497 = scalar_select %p496, %s41, 2
        %s498 = smul.addr %s497, 8
        %s499 = scalar_lea.vmem %s5, %s498
        %p500 = pneg %p208
        %p501 = pneg %p205
        %p502 = pneg %p229
        %p503 = pneg %p226
        %p504 = pneg %p250
        %p505 = pneg %p247
        %p506 = pneg %p271
        %p507 = pneg %p268
        %p508 = pneg %p292
        %p509 = pneg %p289
        %p510 = pneg %p318
        %p511 = pneg %p315
        %s512 = sand.u32 %s305, 1
        %s513 = scalar_lea.sflag [#allocation8], %s512
        %s514 = sand.u32 %s305, 1
        %s515 = smul.addr %s514, 8
        %s516 = scalar_lea.vmem [#allocation7], %s515
        %s517 = sld [smem:[#allocation6 + %s41]]
        %s518 = ssub.s32 %s517, 1
        %p519 = scmp.gt.s32.totalorder %s518, 0
        %s520 = scalar_select %p519, %s518, 0
        %p521 = scmp.lt.s32.totalorder %s42, %s520
        %s522 = scalar_select %p521, %s42, %s520
        %s523 = sld [smem:[#allocation5 + %s41]]
        %s524 = sadd.s32 %s523, %s522
        %p525 = scmp.lt.s32.totalorder %s524, 2
        %s526 = scalar_select %p525, %s524, 2
        %p527 = scmp.lt.s32.totalorder %s526, 2
        %s528 = scalar_select %p527, %s526, 2
        %s529 = scalar_lea.vmem %s2, %s528
        %s530 = sld [smem:[#allocation6 + %s41]]
        %s531 = ssub.s32 %s530, 1
        %p532 = scmp.gt.s32.totalorder %s531, 0
        %s533 = scalar_select %p532, %s531, 0
        %p534 = scmp.lt.s32.totalorder %s42, %s533
        %s535 = scalar_select %p534, %s42, %s533
        %s536 = sld [smem:[#allocation5 + %s41]]
        %s537 = sadd.s32 %s536, %s535
        %p538 = scmp.lt.s32.totalorder %s537, 2
        %s539 = scalar_select %p538, %s537, 2
        %s540 = sld [smem:[#allocation6 + %s41]]
        %s541 = ssub.s32 %s540, 1
        %p542 = scmp.gt.s32.totalorder %s541, 0
        %s543 = scalar_select %p542, %s541, 0
        %p544 = scmp.lt.s32.totalorder %s42, %s543
        %s545 = scalar_select %p544, %s42, %s543
        %s546 = sld [smem:[#allocation5 + %s41]]
        %s547 = sadd.s32 %s546, %s545
        %p548 = scmp.lt.s32.totalorder %s547, 2
        %s549 = scalar_select %p548, %s547, 2
        %s550 = smul.u32 16, %s549
        %p551 = scmp.lt.s32.totalorder %s550, 47
        %s552 = scalar_select %p551, %s550, 47
        %s553 = smul.addr %s552, 4
        %s554 = scalar_lea.vmem %s3, %s553
        %s555 = sld [smem:[#allocation6 + %s41]]
        %s556 = ssub.s32 %s555, 1
        %p557 = scmp.gt.s32.totalorder %s556, 0
        %s558 = scalar_select %p557, %s556, 0
        %p559 = scmp.lt.s32.totalorder %s42, %s558
        %s560 = scalar_select %p559, %s42, %s558
        %s561 = sld [smem:[#allocation5 + %s41]]
        %s562 = sadd.s32 %s561, %s560
        %p563 = scmp.lt.s32.totalorder %s562, 2
        %s564 = scalar_select %p563, %s562, 2
        %s565 = smul.u32 16, %s564
        %s566 = sld [smem:[#allocation6 + %s41]]
        %s567 = ssub.s32 %s566, 1
        %p568 = scmp.gt.s32.totalorder %s567, 0
        %s569 = scalar_select %p568, %s567, 0
        %p570 = scmp.lt.s32.totalorder %s42, %s569
        %s571 = scalar_select %p570, %s42, %s569
        %s572 = sld [smem:[#allocation5 + %s41]]
        %s573 = sadd.s32 %s572, %s571
        %p574 = scmp.lt.s32.totalorder %s573, 2
        %s575 = scalar_select %p574, %s573, 2
        %s576 = smul.u32 16, %s575
        %p577 = scmp.lt.s32.totalorder %s576, 47
        %s578 = scalar_select %p577, %s576, 47
        %s579 = smul.addr %s578, 8
        %s580 = scalar_lea.vmem %s4, %s579
        %s581 = sld [smem:[#allocation6 + %s41]]
        %s582 = ssub.s32 %s581, 1
        %p583 = scmp.gt.s32.totalorder %s582, 0
        %s584 = scalar_select %p583, %s582, 0
        %p585 = scmp.lt.s32.totalorder %s42, %s584
        %s586 = scalar_select %p585, %s42, %s584
        %s587 = sld [smem:[#allocation5 + %s41]]
        %s588 = sadd.s32 %s587, %s586
        %p589 = scmp.lt.s32.totalorder %s588, 2
        %s590 = scalar_select %p589, %s588, 2
        %s591 = smul.u32 16, %s590
        %p592 = scmp.lt.s32.totalorder %s41, 2
        %s593 = scalar_select %p592, %s41, 2
        %s594 = smul.addr %s593, 8
        %s595 = scalar_lea.vmem %s5, %s594
        %p597 = scmp.eq.s32.totalorder %s42, 0
        // Predicated region
        $region53: #{tpu_custom_call.1} parent=51 // pred_check
          %p598 = pneg %p597
        $region54: #{tpu_custom_call.1} parent=51 // pred_check_branch
          %600 = sbr.rel (%p598) target = $region56
        $region55: #{tpu_custom_call.1} parent=51 // pred_region
          %vm601 = vcmask 261120
          %602 = vst.msk [vmem:[#allocation2] sm:$0xff] %vm601, 0.0
          %vm603 = vcmask 7168
          %604 = vst.msk [vmem:[#allocation3] sm:$0xff] %vm603, 0.0
        $region56: #{tpu_custom_call.1} parent=51 // pred_fallthru
          _
        %s605 = sld [smem:[#allocation6 + %s41]]
        %p606 = scmp.lt.s32.totalorder %s42, %s605
        // Predicated region
        $region57: #{tpu_custom_call.1} parent=51 // pred_check
          %p607 = pneg %p606
        $region58: #{tpu_custom_call.1} parent=51 // pred_check_branch
          %609 = sbr.rel (%p607) target = $region60
        $region59: #{tpu_custom_call.1} parent=51 // pred_region
          %v610 = vld [vmem:[%s554] sm:$0xf]
          %v611 = vld [vmem:[%s554 + $0x4] sm:$0xf]
          %v612 = vld [vmem:[%s554 + $0x8] sm:$0xf]
          %v613 = vld [vmem:[%s554 + $0xc] sm:$0xf]
          %v614 = vld [vmem:[%s554 + $0x10] sm:$0xf]
          %v615 = vld [vmem:[%s554 + $0x14] sm:$0xf]
          %v616 = vld [vmem:[%s554 + $0x18] sm:$0xf]
          %v617 = vld [vmem:[%s554 + $0x1c] sm:$0xf]
          %v618 = vld [vmem:[%s554 + $0x20] sm:$0xf]
          %v619 = vld [vmem:[%s554 + $0x24] sm:$0xf]
          %v620 = vld [vmem:[%s554 + $0x28] sm:$0xf]
          %v621 = vld [vmem:[%s554 + $0x2c] sm:$0xf]
          %v622 = vld [vmem:[%s554 + $0x30] sm:$0xf]
          %v623 = vld [vmem:[%s554 + $0x34] sm:$0xf]
          %v624 = vld [vmem:[%s554 + $0x38] sm:$0xf]
          %v625 = vld [vmem:[%s554 + $0x3c] sm:$0xf]
          %v626 = vld [vmem:[%s6] sm:$0xf]
          %v627 = vld [vmem:[%s6 + $0x4] sm:$0xf]
          %v628 = vld [vmem:[%s6 + $0x8] sm:$0xf]
          %v629 = vld [vmem:[%s6 + $0xc] sm:$0xf]
          %v630 = vld [vmem:[%s6 + $0x10] sm:$0xf]
          %v631 = vld [vmem:[%s6 + $0x14] sm:$0xf]
          %v632 = vld [vmem:[%s7] sm:$0x1]
          %v634 = vperm.slane %v632, 0
          %v652 = vunpack.c.l.b16 %v610
          %v653 = vunpack.c.l.b16 %v611
          %v654 = vunpack.c.l.b16 %v612
          %v655 = vunpack.c.l.b16 %v613
          %v656 = vunpack.c.l.b16 %v614
          %v657 = vunpack.c.l.b16 %v615
          %v658 = vunpack.c.l.b16 %v616
          %v659 = vunpack.c.l.b16 %v617
          %v660 = vunpack.c.l.b16 %v618
          %v661 = vunpack.c.l.b16 %v619
          %v662 = vunpack.c.l.b16 %v620
          %v663 = vunpack.c.l.b16 %v621
          %v664 = vunpack.c.l.b16 %v622
          %v665 = vunpack.c.l.b16 %v623
          %v666 = vunpack.c.l.b16 %v624
          %v667 = vunpack.c.l.b16 %v625
          %v668 = vpack.c.b16 %v653, %v652
          %v669 = vpack.c.b16 %v655, %v654
          %v670 = vpack.c.b16 %v657, %v656
          %v671 = vpack.c.b16 %v659, %v658
          %v672 = vpack.c.b16 %v661, %v660
          %v673 = vpack.c.b16 %v663, %v662
          %v674 = vpack.c.b16 %v665, %v664
          %v675 = vpack.c.b16 %v667, %v666
          %v682 = vunpack.c.l.b16 %v626
          %v683 = vunpack.c.l.b16 %v627
          %v684 = vunpack.c.l.b16 %v628
          %v685 = vunpack.c.l.b16 %v629
          %v686 = vunpack.c.l.b16 %v630
          %v687 = vunpack.c.l.b16 %v631
          %v688 = vpack.c.b16 %v683, %v682
          %v689 = vpack.c.b16 %v685, %v684
          %v690 = vpack.c.b16 %v687, %v686
          %vm694 = vcmask 392192
          %v696 = vsel %vm694, %v668, 0
          %v699 = vsel %vm694, %v669, 0
          %v702 = vsel %vm694, %v670, 0
          %v705 = vsel %vm694, %v671, 0
          %v708 = vsel %vm694, %v672, 0
          %v711 = vsel %vm694, %v673, 0
          %v714 = vsel %vm694, %v674, 0
          %v717 = vsel %vm694, %v675, 0
          %719 = vmatpush.bf16.msra.mxu0 0
          %720 = vmatpush.bf16.msra.mxu0 0
          %721 = vmatpush.bf16.msra.mxu0 0
          %722 = vmatpush.bf16.msra.mxu0 0
          %723 = vmatpush.bf16.msra.mxu0 0
          %724 = vmatpush.bf16.msra.mxu0 %v690
          %725 = vmatpush.bf16.msra.mxu0 %v689
          %726 = vmatpush.bf16.msra.mxu0 %v688
          %727 = vmatmul.bf16.gmra.mxu0 %v696
          %v728 = vpop.f32.mrf.mxu0
          %v729 = vadd.f32 %v634, %v728
          %v730 = vpop.f32.mrf.mxu0
          %v731 = vadd.f32 %v634, %v730
          %732 = vmatmul.bf16.gmra.mxu0 %v699
          %v733 = vpop.f32.mrf.mxu0
          %v734 = vadd.f32 %v634, %v733
          %v735 = vpop.f32.mrf.mxu0
          %v736 = vadd.f32 %v634, %v735
          %737 = vmatmul.bf16.gmra.mxu0 %v702
          %v738 = vpop.f32.mrf.mxu0
          %v739 = vadd.f32 %v634, %v738
          %v740 = vpop.f32.mrf.mxu0
          %v741 = vadd.f32 %v634, %v740
          %742 = vmatmul.bf16.gmra.mxu0 %v705
          %v743 = vpop.f32.mrf.mxu0
          %v744 = vadd.f32 %v634, %v743
          %v745 = vpop.f32.mrf.mxu0
          %v746 = vadd.f32 %v634, %v745
          %747 = vmatmul.bf16.gmra.mxu0 %v708
          %v748 = vpop.f32.mrf.mxu0
          %v749 = vadd.f32 %v634, %v748
          %v750 = vpop.f32.mrf.mxu0
          %v751 = vadd.f32 %v634, %v750
          %752 = vmatmul.bf16.gmra.mxu0 %v711
          %v753 = vpop.f32.mrf.mxu0
          %v754 = vadd.f32 %v634, %v753
          %v755 = vpop.f32.mrf.mxu0
          %v756 = vadd.f32 %v634, %v755
          %757 = vmatmul.bf16.gmra.mxu0 %v714
          %v758 = vpop.f32.mrf.mxu0
          %v759 = vadd.f32 %v634, %v758
          %v760 = vpop.f32.mrf.mxu0
          %v761 = vadd.f32 %v634, %v760
          %762 = vmatmul.bf16.gmra.mxu0 %v717
          %v763 = vpop.f32.mrf.mxu0
          %v764 = vadd.f32 %v634, %v763
          %v765 = vpop.f32.mrf.mxu0
          %v766 = vadd.f32 %v634, %v765
          %767 = vdwg.mxu0
          %v768 = vld [vmem:[%s580] sm:$0xff]
          %v769 = vld [vmem:[%s580 + $0x8] sm:$0xff]
          %v770 = vld [vmem:[%s580 + $0x10] sm:$0xff]
          %v771 = vld [vmem:[%s580 + $0x18] sm:$0xff]
          %v772 = vld [vmem:[%s580 + $0x20] sm:$0xff]
          %v773 = vld [vmem:[%s580 + $0x28] sm:$0xff]
          %v774 = vld [vmem:[%s580 + $0x30] sm:$0xff]
          %v775 = vld [vmem:[%s580 + $0x38] sm:$0xff]
          %v776 = vld [vmem:[%s580 + $0x40] sm:$0xff]
          %v777 = vld [vmem:[%s580 + $0x48] sm:$0xff]
          %v778 = vld [vmem:[%s580 + $0x50] sm:$0xff]
          %v779 = vld [vmem:[%s580 + $0x58] sm:$0xff]
          %v780 = vld [vmem:[%s580 + $0x60] sm:$0xff]
          %v781 = vld [vmem:[%s580 + $0x68] sm:$0xff]
          %v782 = vld [vmem:[%s580 + $0x70] sm:$0xff]
          %v783 = vld [vmem:[%s580 + $0x78] sm:$0xff]
          %vm784 = vcmp.gt.f32.partialorder %v768, 0.5
          %vm785 = vcmp.gt.f32.partialorder %v769, 0.5
          %vm786 = vcmp.gt.f32.partialorder %v770, 0.5
          %vm787 = vcmp.gt.f32.partialorder %v771, 0.5
          %vm788 = vcmp.gt.f32.partialorder %v772, 0.5
          %vm789 = vcmp.gt.f32.partialorder %v773, 0.5
          %vm790 = vcmp.gt.f32.partialorder %v774, 0.5
          %vm791 = vcmp.gt.f32.partialorder %v775, 0.5
          %vm792 = vcmp.gt.f32.partialorder %v776, 0.5
          %vm793 = vcmp.gt.f32.partialorder %v777, 0.5
          %vm794 = vcmp.gt.f32.partialorder %v778, 0.5
          %vm795 = vcmp.gt.f32.partialorder %v779, 0.5
          %vm796 = vcmp.gt.f32.partialorder %v780, 0.5
          %vm797 = vcmp.gt.f32.partialorder %v781, 0.5
          %vm798 = vcmp.gt.f32.partialorder %v782, 0.5
          %vm799 = vcmp.gt.f32.partialorder %v783, 0.5
          %v800 = vsel %vm784, 1, 0
          %v801 = vsel %vm785, 1, 0
          %v802 = vsel %vm786, 1, 0
          %v803 = vsel %vm787, 1, 0
          %v804 = vsel %vm788, 1, 0
          %v805 = vsel %vm789, 1, 0
          %v806 = vsel %vm790, 1, 0
          %v807 = vsel %vm791, 1, 0
          %v808 = vsel %vm792, 1, 0
          %v809 = vsel %vm793, 1, 0
          %v810 = vsel %vm794, 1, 0
          %v811 = vsel %vm795, 1, 0
          %v812 = vsel %vm796, 1, 0
          %v813 = vsel %vm797, 1, 0
          %v814 = vsel %vm798, 1, 0
          %v815 = vsel %vm799, 1, 0
          %816 = vset.pattern.permute.xlu0 0
          %817 = vperm.xlu0 %816, %v800
          %v818 = vpop.permute.xlu0 %817
          %819 = vset.pattern.permute.xlu0 0
          %820 = vperm.xlu0 %819, %v801
          %v821 = vpop.permute.xlu0 %820
          %822 = vset.pattern.permute.xlu0 0
          %823 = vperm.xlu0 %822, %v802
          %v824 = vpop.permute.xlu0 %823
          %825 = vset.pattern.permute.xlu0 0
          %826 = vperm.xlu0 %825, %v803
          %v827 = vpop.permute.xlu0 %826
          %828 = vset.pattern.permute.xlu0 0
          %829 = vperm.xlu0 %828, %v804
          %v830 = vpop.permute.xlu0 %829
          %831 = vset.pattern.permute.xlu0 0
          %832 = vperm.xlu0 %831, %v805
          %v833 = vpop.permute.xlu0 %832
          %834 = vset.pattern.permute.xlu0 0
          %835 = vperm.xlu0 %834, %v806
          %v836 = vpop.permute.xlu0 %835
          %837 = vset.pattern.permute.xlu0 0
          %838 = vperm.xlu0 %837, %v807
          %v839 = vpop.permute.xlu0 %838
          %840 = vset.pattern.permute.xlu0 0
          %841 = vperm.xlu0 %840, %v808
          %v842 = vpop.permute.xlu0 %841
          %843 = vset.pattern.permute.xlu0 0
          %844 = vperm.xlu0 %843, %v809
          %v845 = vpop.permute.xlu0 %844
          %846 = vset.pattern.permute.xlu0 0
          %847 = vperm.xlu0 %846, %v810
          %v848 = vpop.permute.xlu0 %847
          %849 = vset.pattern.permute.xlu0 0
          %850 = vperm.xlu0 %849, %v811
          %v851 = vpop.permute.xlu0 %850
          %852 = vset.pattern.permute.xlu0 0
          %853 = vperm.xlu0 %852, %v812
          %v854 = vpop.permute.xlu0 %853
          %855 = vset.pattern.permute.xlu0 0
          %856 = vperm.xlu0 %855, %v813
          %v857 = vpop.permute.xlu0 %856
          %858 = vset.pattern.permute.xlu0 0
          %859 = vperm.xlu0 %858, %v814
          %v860 = vpop.permute.xlu0 %859
          %861 = vset.pattern.permute.xlu0 0
          %862 = vperm.xlu0 %861, %v815
          %v863 = vpop.permute.xlu0 %862
          %vm864 = vcmp.eq.s32.totalorder %v818, 1
          %vm865 = vcmp.eq.s32.totalorder %v821, 1
          %vm866 = vcmp.eq.s32.totalorder %v824, 1
          %vm867 = vcmp.eq.s32.totalorder %v827, 1
          %vm868 = vcmp.eq.s32.totalorder %v830, 1
          %vm869 = vcmp.eq.s32.totalorder %v833, 1
          %vm870 = vcmp.eq.s32.totalorder %v836, 1
          %vm871 = vcmp.eq.s32.totalorder %v839, 1
          %vm872 = vcmp.eq.s32.totalorder %v842, 1
          %vm873 = vcmp.eq.s32.totalorder %v845, 1
          %vm874 = vcmp.eq.s32.totalorder %v848, 1
          %vm875 = vcmp.eq.s32.totalorder %v851, 1
          %vm876 = vcmp.eq.s32.totalorder %v854, 1
          %vm877 = vcmp.eq.s32.totalorder %v857, 1
          %vm878 = vcmp.eq.s32.totalorder %v860, 1
          %vm879 = vcmp.eq.s32.totalorder %v863, 1
          %896 = vrot.lane.b32.xlu0 %v729, 96
          %v897 = vpop.permute.xlu0 %896
          %898 = vrot.lane.b32.xlu0 %v731, 96
          %v899 = vpop.permute.xlu0 %898
          %900 = vrot.lane.b32.xlu0 %v734, 96
          %v901 = vpop.permute.xlu0 %900
          %902 = vrot.lane.b32.xlu0 %v736, 96
          %v903 = vpop.permute.xlu0 %902
          %904 = vrot.lane.b32.xlu0 %v739, 96
          %v905 = vpop.permute.xlu0 %904
          %906 = vrot.lane.b32.xlu0 %v741, 96
          %v907 = vpop.permute.xlu0 %906
          %908 = vrot.lane.b32.xlu0 %v744, 96
          %v909 = vpop.permute.xlu0 %908
          %910 = vrot.lane.b32.xlu0 %v746, 96
          %v911 = vpop.permute.xlu0 %910
          %912 = vrot.lane.b32.xlu0 %v749, 96
          %v913 = vpop.permute.xlu0 %912
          %914 = vrot.lane.b32.xlu0 %v751, 96
          %v915 = vpop.permute.xlu0 %914
          %916 = vrot.lane.b32.xlu0 %v754, 96
          %v917 = vpop.permute.xlu0 %916
          %918 = vrot.lane.b32.xlu0 %v756, 96
          %v919 = vpop.permute.xlu0 %918
          %920 = vrot.lane.b32.xlu0 %v759, 96
          %v921 = vpop.permute.xlu0 %920
          %922 = vrot.lane.b32.xlu0 %v761, 96
          %v923 = vpop.permute.xlu0 %922
          %924 = vrot.lane.b32.xlu0 %v764, 96
          %v925 = vpop.permute.xlu0 %924
          %926 = vrot.lane.b32.xlu0 %v766, 96
          %v927 = vpop.permute.xlu0 %926
          %v944 = vsel %vm864, %v729, %v897
          %v945 = vsel %vm865, %v731, %v899
          %v946 = vsel %vm866, %v734, %v901
          %v947 = vsel %vm867, %v736, %v903
          %v948 = vsel %vm868, %v739, %v905
          %v949 = vsel %vm869, %v741, %v907
          %v950 = vsel %vm870, %v744, %v909
          %v951 = vsel %vm871, %v746, %v911
          %v952 = vsel %vm872, %v749, %v913
          %v953 = vsel %vm873, %v751, %v915
          %v954 = vsel %vm874, %v754, %v917
          %v955 = vsel %vm875, %v756, %v919
          %v956 = vsel %vm876, %v759, %v921
          %v957 = vsel %vm877, %v761, %v923
          %v958 = vsel %vm878, %v764, %v925
          %v959 = vsel %vm879, %v766, %v927
          %s960 = smul.u32 %s41, 8
          %v961 = vlaneseq
          %v962 = vshrl.u32 %v961, 7
          %v963 = vstv %s960
          %v964 = vadd.s32 %v963, %v962
          %v965 = vld [vmem:[%s529] sm:$0x1]
          %v966 = vperm.slane %v965, 0
          %vm967 = vcmp.eq.s32.totalorder %v964, %v966
          %v968 = vld [vmem:[#allocation2] sm:$0xff]
          %v969 = vsel %vm967, 1, 0
          %v970 = vcvt.s32.f32 %v969
          %v971 = vpack.c.bf16 %v970, %v970
          %v972 = vpack.c.bf16 %v945, %v944
          %v973 = vpack.c.bf16 %v947, %v946
          %v974 = vpack.c.bf16 %v949, %v948
          %v975 = vpack.c.bf16 %v951, %v950
          %v976 = vpack.c.bf16 %v953, %v952
          %v977 = vpack.c.bf16 %v955, %v954
          %v978 = vpack.c.bf16 %v957, %v956
          %v979 = vpack.c.bf16 %v959, %v958
          %980 = vmatpush.bf16.msra.mxu0 %v979
          %981 = vmatpush.bf16.msra.mxu0 %v978
          %982 = vmatpush.bf16.msra.mxu0 %v977
          %983 = vmatpush.bf16.msra.mxu0 %v976
          %984 = vmatpush.bf16.msra.mxu0 %v975
          %985 = vmatpush.bf16.msra.mxu0 %v974
          %986 = vmatpush.bf16.msra.mxu0 %v973
          %987 = vmatpush.bf16.msra.mxu0 %v972
          %988 = vmatmul.bf16.gmra.mxu0 %v971
          %v989 = vpop.f32.mrf.mxu0
          %v990 = vadd.f32 0.0, %v989
          %v991 = vpop.f32.mrf.mxu0
          %992 = vdwg.mxu0
          %v993 = vadd.f32 %v968, %v990
          %vm994 = vcmask 261120
          %995 = vst.msk [vmem:[#allocation2] sm:$0xff] %vm994, %v993
          %v996 = vld [vmem:[#allocation3] sm:$0xff]
          %997 = vadd.xlane.f32.xlu0 %v970
          %v998 = vpop.xlane.xlu0 %997
          %v999 = vadd.f32 %v996, %v998
          %vm1000 = vcmask 7168
          %1001 = vst.msk [vmem:[#allocation3] sm:$0xff] %vm1000, %v999
        $region60: #{tpu_custom_call.1} parent=51 // pred_fallthru
          _
        %p1002 = scmp.eq.s32.totalorder %s42, 1
        // Predicated region
        $region61: #{tpu_custom_call.1} parent=51 // pred_check
          %p1003 = pneg %p1002
        $region62: #{tpu_custom_call.1} parent=51 // pred_check_branch
          %1005 = sbr.rel (%p1003) target = $region64
        $region63: #{tpu_custom_call.1} parent=51 // pred_region
          %v1006 = vld [vmem:[#allocation3] sm:$0xff]
          %vm1007 = vcmp.gt.f32.partialorder %v1006, 0.0
          %v1008 = vmax.f32 %v1006, 1.0
          %v1009 = vrcp.pop %v1008
          %v1010 = vmul.f32 %v1008, %v1009
          %v1011 = vsub.f32 1.0, %v1010
          %v1012 = vmul.f32 %v1009, %v1011
          %v1013 = vadd.f32 %v1009, %v1012
          %vm1014 = vweird.f32 %v1008
          %vm1015 = vweird.f32 %v1009
          %vm1016 = vmor %vm1014, %vm1015
          %v1017 = vsel %vm1016, %v1009, %v1013
          %v1018 = vand.u32 2147483647, %v1008
          %vm1019 = vcmp.eq.f32.partialorder %v1018, 8.507059e+37
          %v1020 = vand.u32 %v1008, 2147483648
          %v1021 = vor.u32 1.1754944e-38, %v1020
          %v1022 = vsel %vm1019, %v1021, %v1017
          %v1023 = vmul.f32 1.0, %v1022
          %v1024 = vsel %vm1007, %v1023, 0.0
          %v1025 = vld [vmem:[%s595] sm:$0xff]
          %v1026 = vld [vmem:[%s8] sm:$0xff]
          %v1027 = vld [vmem:[%s8 + $0x8] sm:$0xff]
          %v1028 = vld [vmem:[%s8 + $0x10] sm:$0xff]
          %v1029 = vld [vmem:[%s8 + $0x18] sm:$0xff]
          %v1030 = vld [vmem:[%s9] sm:$0x1]
          %v1032 = vperm.slane %v1030, 0
          %vm1034 = vcmask 261120
          %v1036 = vsel %vm1034, %v1025, 0
          %1038 = vmatpush.msra.mxu0 0.0
          %1039 = vmatpush.msra.mxu0 0.0
          %1040 = vmatpush.msra.mxu0 0.0
          %1041 = vmatpush.msra.mxu0 0.0
          %1042 = vmatpush.msra.mxu0 0.0
          %1043 = vmatpush.msra.mxu0 0.0
          %1044 = vmatpush.msra.mxu0 0.0
          %1045 = vmatpush.msra.mxu0 0.0
          %1046 = vmatpush.msra.mxu0 0.0
          %1047 = vmatpush.msra.mxu0 0.0
          %1048 = vmatpush.msra.mxu0 0.0
          %1049 = vmatpush.msra.mxu0 0.0
          %1050 = vmatpush.msra.mxu0 %v1029
          %1051 = vmatpush.msra.mxu0 %v1028
          %1052 = vmatpush.msra.mxu0 %v1027
          %1053 = vmatpush.msra.mxu0 %v1026
          %1054 = vmatmul.f32.gmra.mxu0 %v1036
          %v1055 = vpop.f32.mrf.mxu0
          %v1056 = vadd.f32 %v1032, %v1055
          %1057 = vdwg.mxu0
          %v1058 = vld [vmem:[#allocation2] sm:$0xff]
          %1060 = vset.pattern.permute.xlu0 0
          %1061 = vperm.xlu0 %1060, %v1024
          %v1062 = vpop.permute.xlu0 %1061
          %v1064 = vmul.f32 %v1058, %v1062
          %v1065 = vadd.f32 %v1056, %v1064
          %1066 = vst.msk [vmem:[%s516] sm:$0xff] %vm1034, %v1065
        $region64: #{tpu_custom_call.1} parent=51 // pred_fallthru
          _
        %s1067 = sand.u32 %s305, 1
        %s1068 = scalar_lea.sflag [#allocation8], %s1067
        %s1069 = sand.u32 %s305, 1
        %s1070 = smul.addr %s1069, 8
        %s1071 = scalar_lea.vmem [#allocation7], %s1070
        // Predicated region
        $region65: #{tpu_custom_call.1} parent=51 // pred_check
          %p1072 = pneg %p315
        $region66: #{tpu_custom_call.1} parent=51 // pred_check_branch
          %1074 = sbr.rel (%p1072) target = $region68
        $region67: #{tpu_custom_call.1} parent=51 // pred_region
          %1076 = vsyncadd %s1068, 0
          %s1077 = smul.addr %s41, 8
          %s1078 = scalar_lea.hbm %s10, %s1077
          %s1080 = sshll.u32 %s1071, 4
          %s1081 = int_to_ptr.vmem [resolvable:$true] %s1080
          %s1082 = sshll.u32 %s1078, 4
          %s1083 = int_to_ptr.hbm [resolvable:$true] %s1082
          %1085 = dma.vmem_to_hbm [thread:$0]  %s1081, 128, %s1083, %s1068
        $region68: #{tpu_custom_call.1} parent=51 // pred_fallthru
          _
      $region52: #{tpu_custom_call.1} parent=5 // pred_fallthru
        _
      %p1086 = scmp.le.s32.totalorder 2, %s32
      // Predicated region
      $region69: #{tpu_custom_call.1} parent=5 // pred_check
        %p1087 = pneg %p1086
      $region70: #{tpu_custom_call.1} parent=5 // pred_check_branch
        %1089 = sbr.rel (%p1087) target = $region72
      $region71: #{tpu_custom_call.1} parent=5 // pred_region
        %s1090 = ssub.s32 %s32, 2
        // Predicated region
        $region73: #{tpu_custom_call.1} parent=71 // pred_check
          %p1091 = pneg %p321
        $region74: #{tpu_custom_call.1} parent=71 // pred_check_branch
          %1093 = sbr.rel (%p1091) target = $region76
        $region75: #{tpu_custom_call.1} parent=71 // pred_region
          %s1094 = sand.u32 %s306, 1
          %s1095 = scalar_lea.sflag [#allocation8], %s1094
          %s1096 = sand.u32 %s306, 1
          %s1097 = smul.addr %s1096, 8
          %s1098 = scalar_lea.vmem [#allocation7], %s1097
          %1100 = dma.done %s1095, 128
        $region76: #{tpu_custom_call.1} parent=71 // pred_fallthru
          _
      $region72: #{tpu_custom_call.1} parent=5 // pred_fallthru
        _
    $region6: #{tpu_custom_call.1} parent=1 // loop_footer
      %s36 = sadd.s32 1, %s32
    $region7: #{tpu_custom_call.1} parent=1 // loop_footer_branch
      %31 = sbr.rel target = $region3
    $region8: #{tpu_custom_call.1} parent=1 // loop_exit
      _
    %1101 = vsyncpa [#allocation8], 1
    %s1102 = scalar_lea.sflag [#allocation8], 1
    %1103 = vsyncpa %s1102, 1

</llo_original>
